<compile_context>
chip_gen: v5e
topology: v5e:2x2
jax: 0.10.0
libtpu: 0.0.40
codegen_flags: <defaults>
</compile_context>

<pallas_src>
import functools
import math

import jax
import jax.numpy as jnp
from jax import lax
from jax.experimental import pallas as pl
from jax.experimental.pallas import tpu as pltpu

_NEG_BIG = -1e30          # finite "-inf": masked entries exp to 0, never NaN


def _hw_defaults():
    """Per-generation scoped-VMEM limit and default tile sizes.

    v5e/v6e have 128 MiB physical VMEM -> big tiles + generous scoped limit;
    v7x has 64 MiB per TensorCore (or unknown backend) -> conservative."""
    vmem_cap = None
    try:
        vmem_cap = getattr(pltpu.get_tpu_info(), "vmem_capacity_bytes", None)
    except Exception:
        vmem_cap = None
    if vmem_cap is not None and vmem_cap >= 96 * (1 << 20):
        return dict(vmem_limit=100 * (1 << 20), block_q=512, block_k=512, block_rows=512)
    return dict(vmem_limit=48 * (1 << 20), block_q=256, block_k=256, block_rows=256)


def _pick_tile(dim, desired, align=16):
    """Largest tile <= desired that divides `dim` and is a multiple of `align`
    (falls back to coarser alignments, then to the full dim)."""
    if dim <= desired:
        return dim
    for a in (align, 16, 8):
        t = (min(desired, dim) // a) * a
        while t >= a:
            if dim % t == 0:
                return t
            t -= a
    # TODO(synk): support non-dividing tiles (masked tail) instead of a full-dim fallback.
    return dim


# ---------------------------------------------------------------------------
# 1) Head-major linear projection.
#    One full-width matmul per (n, row-tile); the per-head split is layout-only
#    (static slices).  transposed=True stores K^T (lane-dense, natural rhs of
#    Q @ K^T); the 1/sqrt(d_keys) scale is folded into Q at projection time.
# ---------------------------------------------------------------------------
def _proj_kernel(x_ref, w_ref, b_ref, o_ref, *, n_heads, scale, transposed):
    y = jnp.dot(x_ref[0], w_ref[...], preferred_element_type=jnp.float32)
    y = y + b_ref[...]
    if scale != 1.0:
        y = y * scale
    if transposed:
        dh = o_ref.shape[2]
        yT = y.T                                               # one XLU transpose / tile
        for h in range(n_heads):                               # static sublane slices
            o_ref[0, h] = yT[h * dh:(h + 1) * dh, :].astype(o_ref.dtype)
    else:
        dh = o_ref.shape[3]
        for h in range(n_heads):                               # static lane slices
            o_ref[0, h] = y[:, h * dh:(h + 1) * dh].astype(o_ref.dtype)


def _project_heads(x, w, b, *, n_heads, scale, transposed, block_rows, vmem_limit):
    """x (N, R, d_in) @ w (d_in, H*d_head) + b, written head-major:
         transposed=False -> (N, H, R, d_head)  (Q and V)
         transposed=True  -> (N, H, d_head, R)  (K^T)"""
    N, R, d_in = x.shape
    d_out = w.shape[1]
    d_head = d_out // n_heads
    tr = _pick_tile(R, block_rows, align=128)    # 128: R becomes the lane dim of K^T
    kernel = functools.partial(_proj_kernel, n_heads=n_heads, scale=scale,
                               transposed=transposed)
    if transposed:
        out_shape = jax.ShapeDtypeStruct((N, n_heads, d_head, R), jnp.bfloat16)
        out_spec = pl.BlockSpec((1, n_heads, d_head, tr), lambda n, r: (n, 0, 0, r))
    else:
        out_shape = jax.ShapeDtypeStruct((N, n_heads, R, d_head), jnp.bfloat16)
        out_spec = pl.BlockSpec((1, n_heads, tr, d_head), lambda n, r: (n, 0, r, 0))
    return pl.pallas_call(
        kernel,
        out_shape=out_shape,
        grid_spec=pltpu.PrefetchScalarGridSpec(
            num_scalar_prefetch=0,
            grid=(N, R // tr),
            in_specs=[
                pl.BlockSpec((1, tr, d_in), lambda n, r: (n, r, 0)),
                pl.BlockSpec((d_in, d_out), lambda n, r: (0, 0)),   # resident once
                pl.BlockSpec((1, d_out), lambda n, r: (0, 0)),      # resident once
            ],
            out_specs=out_spec),
        compiler_params=pltpu.CompilerParams(
            dimension_semantics=("parallel", "parallel"),
            vmem_limit_bytes=vmem_limit),
    )(x, w, b)


# ---------------------------------------------------------------------------
# 2) Flash-attention kernel (return_QK=False): online softmax over S tiles,
#    single full-depth output-projection matmul at the final S step.
# ---------------------------------------------------------------------------
def _flash_attn_kernel(q_ref, k_ref, v_ref, wo_ref, bo_ref, out_ref,
                       m_scr, l_scr, acc_scr, *, n_heads, tq, tk, causal):
    qi = pl.program_id(1)
    ki = pl.program_id(2)

    @pl.when(ki == 0)
    def _init():
        m_scr[...] = jnp.full_like(m_scr, _NEG_BIG)
        l_scr[...] = jnp.zeros_like(l_scr)
        acc_scr[...] = jnp.zeros_like(acc_scr)

    def _step(masked):
        q = q_ref[0]                                   # (H, tq, dk) bf16, pre-scaled
        kT = k_ref[0]                                  # (H, dk, tk) bf16
        v = v_ref[0]                                   # (H, tk, dv) bf16
        s = jnp.einsum("hqd,hdk->hqk", q, kT,
                       preferred_element_type=jnp.float32)          # (H, tq, tk) f32
        if masked:
            rows = qi * tq + lax.broadcasted_iota(jnp.int32, (tq, tk), 0)
            cols = ki * tk + lax.broadcasted_iota(jnp.int32, (tq, tk), 1)
            s = jnp.where((cols > rows)[None, :, :], _NEG_BIG, s)
        m_prev = m_scr[...]                                          # (H, tq, 1)
        m_new = jnp.maximum(m_prev, jnp.max(s, axis=-1, keepdims=True))
        alpha = jnp.exp(m_prev - m_new)
        p = jnp.exp(s - m_new)                                       # (H, tq, tk)
        l_scr[...] = alpha * l_scr[...] + jnp.sum(p, axis=-1, keepdims=True)
        pv = jnp.einsum("hqk,hkd->hqd", p.astype(v.dtype), v,
                        preferred_element_type=jnp.float32)          # (H, tq, dv)
        acc_scr[...] = alpha * acc_scr[...] + pv
        m_scr[...] = m_new

    if causal:
        first_q = qi * tq
        last_q = first_q + (tq - 1)
        first_k = ki * tk
        last_k = first_k + (tk - 1)
        not_skipped = first_k <= last_q          # tile has >= 1 unmasked element
        crosses_diag = last_k > first_q          # tile has >= 1 masked element

        @pl.when(jnp.logical_and(not_skipped, crosses_diag))
        def _masked():
            _step(True)

        @pl.when(jnp.logical_and(not_skipped, jnp.logical_not(crosses_diag)))
        def _unmasked():                         # fully below the diagonal: no mask math
            _step(False)
    else:
        _step(False)

    @pl.when(ki == pl.num_programs(2) - 1)
    def _finalize():
        inv_l = pl.reciprocal(l_scr[...], approx=True)               # (H, tq, 1)
        # Single XLU relayout (lane concat) once per finalize, then ONE
        # full-depth (tq, H*dv) @ (H*dv, d_model) MXU matmul.
        o_flat = jnp.concatenate(
            [(acc_scr[h] * inv_l[h]).astype(jnp.bfloat16) for h in range(n_heads)],
            axis=-1)                                                 # (tq, H*dv)
        out = jnp.dot(o_flat, wo_ref[...],
                      preferred_element_type=jnp.float32) + bo_ref[...]
        out_ref[0] = out.astype(out_ref.dtype)


# ---------------------------------------------------------------------------
# 3) Variant used only when return_QK=True: full-S softmax per L tile, also
#    emits the head-averaged attention map (exact normalization).
# ---------------------------------------------------------------------------
def _attn_with_map_kernel(q_ref, k_ref, v_ref, wo_ref, bo_ref, out_ref, qk_ref,
                          *, n_heads, tq, causal):
    qi = pl.program_id(1)
    q = q_ref[0]                                        # (H, tq, dk) bf16, pre-scaled
    kT = k_ref[0]                                       # (H, dk, S)  bf16
    v = v_ref[0]                                        # (H, S, dv)  bf16
    s = jnp.einsum("hqd,hdk->hqk", q, kT,
                   preferred_element_type=jnp.float32)               # (H, tq, S)
    if causal:
        S = kT.shape[-1]
        rows = qi * tq + lax.broadcasted_iota(jnp.int32, (tq, S), 0)
        cols = lax.broadcasted_iota(jnp.int32, (tq, S), 1)
        s = jnp.where((cols > rows)[None, :, :], _NEG_BIG, s)
    m = jnp.max(s, axis=-1, keepdims=True)
    p = jnp.exp(s - m)
    p = p / jnp.sum(p, axis=-1, keepdims=True)          # exact: map is consumed downstream
    qk_ref[0] = (jnp.sum(p, axis=0) * (1.0 / n_heads)).astype(qk_ref.dtype)
    attn = jnp.einsum("hqk,hkd->hqd", p.astype(v.dtype), v,
                      preferred_element_type=jnp.float32)             # (H, tq, dv)
    o_flat = jnp.concatenate([attn[h].astype(jnp.bfloat16) for h in range(n_heads)],
                             axis=-1)                                 # (tq, H*dv)
    out = jnp.dot(o_flat, wo_ref[...], preferred_element_type=jnp.float32) + bo_ref[...]
    out_ref[0] = out.astype(out_ref.dtype)


# ---------------------------------------------------------------------------
# Wrapper = FullAttentionLayer.forward
# ---------------------------------------------------------------------------
def full_attention_layer(queries, keys, values, params, *, n_heads,
                         causal=False, return_QK=False,
                         block_q=None, block_k=None, block_rows=None,
                         vmem_limit_bytes=None, out_dtype=jnp.float32,
                         kv_buffers=2):
    """queries: (N, L, d_model); keys/values: (N, S, d_model_keys).
    params: wq/wk/wv/wo stored pre-transposed as (in, out); biases (1, out).
    Returns (out, QK) with out: (N, L, d_model), QK: (N, L, S) or None."""
    N, L, d_model = queries.shape
    _, S, _ = keys.shape
    d_keys = params["wq"].shape[1] // n_heads
    d_values = params["wv"].shape[1] // n_heads
    bf16, f32 = jnp.bfloat16, jnp.float32

    hw = _hw_defaults()
    vmem_limit = vmem_limit_bytes or hw["vmem_limit"]
    block_q = block_q or hw["block_q"]
    block_k = block_k or hw["block_k"]
    block_rows = block_rows or hw["block_rows"]

    # Full-width bf16 weights; wo stays 2-D (H*d_values, d_model) and is used as-is.
    wq = params["wq"].astype(bf16)
    wk = params["wk"].astype(bf16)
    wv = params["wv"].astype(bf16)
    wo = params["wo"].astype(bf16)
    bq = params["bq"].reshape(1, -1).astype(f32)
    bk = params["bk"].reshape(1, -1).astype(f32)
    bv = params["bv"].reshape(1, -1).astype(f32)
    bo = params["bo"].reshape(1, -1).astype(f32)

    # Projections: K/V projected exactly once; scale folded into Q; K stored
    # transposed (N, H, d_keys, S) so stores + attention-side DMAs are lane-dense.
    scale = 1.0 / math.sqrt(d_keys)
    common = dict(n_heads=n_heads, block_rows=block_rows, vmem_limit=vmem_limit)
    Qh = _project_heads(queries.astype(bf16), wq, bq, scale=scale, transposed=False, **common)
    Kt = _project_heads(keys.astype(bf16), wk, bk, scale=1.0, transposed=True, **common)
    Vh = _project_heads(values.astype(bf16), wv, bv, scale=1.0, transposed=False, **common)

    tq = _pick_tile(L, block_q, align=16)
    # v7x has 2 TensorCores: keep at least 2 programs on the parallel axes.
    if N * (L // tq) < 2 and tq % 32 == 0:
        tq //= 2

    # Constant block index => DMA'd into VMEM once for the whole grid.
    wo_spec = pl.BlockSpec((n_heads * d_values, d_model), lambda *_: (0, 0))
    bo_spec = pl.BlockSpec((1, d_model), lambda *_: (0, 0))

    if not return_QK:
        # Flash path: the (N, L, S) attention map is compiled out entirely.
        tk = _pick_tile(S, block_k, align=128)
        if causal:
            # Clamp fully-skipped (above-diagonal) KV tiles onto the last needed
            # tile so the pipeline re-uses the resident block instead of DMA-ing.
            def kT_map(n, i, j):
                return (n, 0, 0, jnp.minimum(j, (i * tq + tq - 1) // tk))

            def v_map(n, i, j):
                return (n, 0, jnp.minimum(j, (i * tq + tq - 1) // tk), 0)
        else:
            kT_map = lambda n, i, j: (n, 0, 0, j)
            v_map = lambda n, i, j: (n, 0, j, 0)

        spec_kw = {}
        if kv_buffers and kv_buffers > 2:
            # Optional deeper K/V buffering (v5e/v6e VMEM headroom) if DMA is exposed.
            spec_kw["pipeline_mode"] = pl.Buffered(kv_buffers)

        kernel = functools.partial(_flash_attn_kernel, n_heads=n_heads,
                                   tq=tq, tk=tk, causal=causal)
        out = pl.pallas_call(
            kernel,
            out_shape=jax.ShapeDtypeStruct((N, L, d_model), out_dtype),
            grid_spec=pltpu.PrefetchScalarGridSpec(
                num_scalar_prefetch=0,
                grid=(N, L // tq, S // tk),
                in_specs=[
                    pl.BlockSpec((1, n_heads, tq, d_keys), lambda n, i, j: (n, 0, i, 0)),
                    pl.BlockSpec((1, n_heads, d_keys, tk), kT_map, **spec_kw),
                    pl.BlockSpec((1, n_heads, tk, d_values), v_map, **spec_kw),
                    wo_spec, bo_spec,
                ],
                out_specs=pl.BlockSpec((1, tq, d_model), lambda n, i, j: (n, i, 0)),
                scratch_shapes=[
                    pltpu.VMEM((n_heads, tq, 1), f32),          # running max
                    pltpu.VMEM((n_heads, tq, 1), f32),          # running denominator
                    pltpu.VMEM((n_heads, tq, d_values), f32),   # running numerator
                ]),
            compiler_params=pltpu.CompilerParams(
                dimension_semantics=("parallel", "parallel", "arbitrary"),
                vmem_limit_bytes=vmem_limit),
        )(Qh, Kt, Vh, wo, bo)
        return out, None

    # return_QK=True: the map is O(L*S) output anyway, so keep full S per step,
    # but shrink tq so the (H, tq, S) scores stay under the VMEM budget (v7x).
    # TODO(synk): tile S (two-pass softmax) for very long sequences on v7x.
    def _map_path_bytes(t):
        return (3 * n_heads * t * S * 4
                + 2 * n_heads * t * d_keys * 2
                + 2 * n_heads * S * (d_keys + d_values) * 2
                + 2 * t * (d_model + S) * 4)

    while _map_path_bytes(tq) > 0.8 * vmem_limit and tq > 16 and tq % 32 == 0:
        tq //= 2

    kernel = functools.partial(_attn_with_map_kernel, n_heads=n_heads,
                               tq=tq, causal=causal)
    out, qk = pl.pallas_call(
        kernel,
        out_shape=(jax.ShapeDtypeStruct((N, L, d_model), out_dtype),
                   jax.ShapeDtypeStruct((N, L, S), f32)),
        grid_spec=pltpu.PrefetchScalarGridSpec(
            num_scalar_prefetch=0,
            grid=(N, L // tq),
            in_specs=[
                pl.BlockSpec((1, n_heads, tq, d_keys), lambda n, i: (n, 0, i, 0)),
                pl.BlockSpec((1, n_heads, d_keys, S), lambda n, i: (n, 0, 0, 0)),
                pl.BlockSpec((1, n_heads, S, d_values), lambda n, i: (n, 0, 0, 0)),
                wo_spec, bo_spec,
            ],
            out_specs=[
                pl.BlockSpec((1, tq, d_model), lambda n, i: (n, i, 0)),
                pl.BlockSpec((1, tq, S), lambda n, i: (n, i, 0)),
            ]),
        compiler_params=pltpu.CompilerParams(
            dimension_semantics=("parallel", "parallel"),
            vmem_limit_bytes=vmem_limit),
    )(Qh, Kt, Vh, wo, bo)
    return out, qk


def _reference(queries, keys, values, params, *, n_heads, causal=False):
    """Pure-JAX f32 reference mirroring the PyTorch forward."""
    N, L, _ = queries.shape
    _, S, _ = keys.shape
    H = n_heads
    Q = queries @ params["wq"] + params["bq"]
    K = keys @ params["wk"] + params["bk"]
    V = values @ params["wv"] + params["bv"]
    Q = Q.reshape(N, L, H, -1)
    K = K.reshape(N, S, H, -1)
    V = V.reshape(N, S, H, -1)
    D = K.shape[-1]
    sm = jnp.einsum("nlhd,nshd->nlhs", Q, K) / math.sqrt(D)
    if causal:
        row = lax.broadcasted_iota(jnp.int32, (L, S), 0)
        col = lax.broadcasted_iota(jnp.int32, (L, S), 1)
        sm = jnp.where((col > row)[None, :, None, :], -jnp.inf, sm)
    sm = jax.nn.softmax(sm, axis=-1)
    attn = jnp.einsum("nlhs,nshd->nlhd", sm, V).reshape(N, L, -1)
    out = attn @ params["wo"] + params["bo"]
    return out, sm.mean(axis=2)


if __name__ == "__main__":
    # Small, TPU-friendly configuration with multiple tiles per axis so the
    # flash tiling, causal tile skipping and masked/unmasked split are exercised.
    N, L, S = 2, 256, 256
    d_model, n_heads = 128, 4
    d_keys = d_values = d_model // n_heads

    key = jax.random.PRNGKey(0)
    ks = jax.random.split(key, 12)

    def init_linear(kw, kb, fan_in, fan_out):
        bound = 1.0 / math.sqrt(fan_in)
        w = jax.random.uniform(kw, (fan_in, fan_out), jnp.float32, -bound, bound)
        b = jax.random.uniform(kb, (1, fan_out), jnp.float32, -bound, bound)
        return w, b

    wq, bq = init_linear(ks[0], ks[1], d_model, d_keys * n_heads)
    wk, bk = init_linear(ks[2], ks[3], d_model, d_keys * n_heads)
    wv, bv = init_linear(ks[4], ks[5], d_model, d_values * n_heads)
    wo, bo = init_linear(ks[6], ks[7], d_values * n_heads, d_model)
    params = dict(wq=wq, bq=bq, wk=wk, bk=bk, wv=wv, bv=bv, wo=wo, bo=bo)

    queries = jax.random.normal(ks[8], (N, L, d_model), jnp.float32)
    keys_in = jax.random.normal(ks[9], (N, S, d_model), jnp.float32)
    values_in = jax.random.normal(ks[10], (N, S, d_model), jnp.float32)

    # bf16 MXU inputs + approx reciprocal => compare with bf16-level tolerance.
    tol = dict(rtol=2e-2, atol=2e-2)
    for causal in (False, True):
        ref_out, ref_qk = _reference(queries, keys_in, values_in, params,
                                     n_heads=n_heads, causal=causal)
        for return_QK in (False, True):
            out, qk = full_attention_layer(queries, keys_in, values_in, params,
                                           n_heads=n_heads, causal=causal,
                                           return_QK=return_QK,
                                           block_q=128, block_k=128, block_rows=128)
            out = jax.block_until_ready(out)
            assert out.shape == (N, L, d_model)
            assert jnp.allclose(out, ref_out, **tol), (
                "out mismatch", causal, return_QK,
                float(jnp.max(jnp.abs(out - ref_out))))
            if return_QK:
                qk = jax.block_until_ready(qk)
                assert qk.shape == (N, L, S)
                assert jnp.allclose(qk, ref_qk, **tol), (
                    "qk mismatch", causal,
                    float(jnp.max(jnp.abs(qk - ref_qk))))
            else:
                assert qk is None

    print("KERNEL_OK")
</pallas_src>

<mosaic_0001>
module attributes {stable_mosaic.version = 11 : i64} {
  func.func @_proj_kernel(%arg0: i32, %arg1: i32, %arg2: memref<1x128x128xbf16, #tpu.memory_space<vmem>>, %arg3: memref<128x128xbf16, #tpu.memory_space<vmem>>, %arg4: memref<1x128xf32, #tpu.memory_space<vmem>>, %arg5: memref<1x4x128x32xbf16, #tpu.memory_space<vmem>>) attributes {dimension_semantics = [#tpu.dimension_semantics<parallel>, #tpu.dimension_semantics<parallel>], iteration_bounds = array<i64: 2, 2>, scalar_prefetch = 0 : i64, scratch_operands = 0 : i64, tpu.core_type = #tpu.core_type<tc>, window_params = [{transform_indices = @transform_0, window_bounds = array<i64: 1, 128, 128>}, {pipeline_mode = #tpu.pipeline_mode<synchronous>, transform_indices = @transform_1, window_bounds = array<i64: 128, 128>}, {pipeline_mode = #tpu.pipeline_mode<synchronous>, transform_indices = @transform_2, window_bounds = array<i64: 1, 128>}, {transform_indices = @transform_3, window_bounds = array<i64: 1, 4, 128, 32>}]} {
    %c0 = arith.constant 0 : index
    %c0_0 = arith.constant 0 : index
    %c0_1 = arith.constant 0 : index
    %0 = vector.load %arg2[%c0, %c0_0, %c0_1] : memref<1x128x128xbf16, #tpu.memory_space<vmem>>, vector<1x128x128xbf16>
    %1 = vector.shape_cast %0 : vector<1x128x128xbf16> to vector<128x128xbf16>
    %c0_2 = arith.constant 0 : index
    %c0_3 = arith.constant 0 : index
    %2 = vector.load %arg3[%c0_2, %c0_3] : memref<128x128xbf16, #tpu.memory_space<vmem>>, vector<128x128xbf16>
    %cst = arith.constant dense<0.000000e+00> : vector<128x128xf32>
    %3 = tpu.matmul %1, %2, %cst {dimension_numbers = #tpu.dot_dimension_numbers<[1], [0], [0], [1], [0, 0, 1, 1], [], []>} : vector<128x128xbf16>, vector<128x128xbf16>, vector<128x128xf32> -> vector<128x128xf32>
    %c0_4 = arith.constant 0 : index
    %c0_5 = arith.constant 0 : index
    %4 = vector.load %arg4[%c0_4, %c0_5] : memref<1x128xf32, #tpu.memory_space<vmem>>, vector<1x128xf32>
    %5 = vector.broadcast %4 : vector<1x128xf32> to vector<128x128xf32>
    %6 = arith.addf %3, %5 : vector<128x128xf32>
    %cst_6 = arith.constant 0.176776692 : f32
    %7 = vector.broadcast %cst_6 : f32 to vector<128x128xf32>
    %8 = arith.mulf %6, %7 : vector<128x128xf32>
    %9 = vector.extract_strided_slice %8 {offsets = [0, 0], sizes = [128, 32], strides = [1, 1]} : vector<128x128xf32> to vector<128x32xf32>
    %10 = arith.truncf %9 : vector<128x32xf32> to vector<128x32xbf16>
    %c0_7 = arith.constant 0 : index
    %c0_8 = arith.constant 0 : index
    %c0_9 = arith.constant 0 : index
    %c0_10 = arith.constant 0 : index
    %11 = vector.load %arg5[%c0_7, %c0_8, %c0_9, %c0_10] : memref<1x4x128x32xbf16, #tpu.memory_space<vmem>>, vector<1x1x128x32xbf16>
    %12 = vector.shape_cast %11 : vector<1x1x128x32xbf16> to vector<128x32xbf16>
    %13 = vector.shape_cast %10 : vector<128x32xbf16> to vector<1x1x128x32xbf16>
    tpu.vector_store %arg5[%c0_7, %c0_8, %c0_9, %c0_10], %13 {strides = array<i32>} : memref<1x4x128x32xbf16, #tpu.memory_space<vmem>>, vector<1x1x128x32xbf16>,
    %14 = vector.extract_strided_slice %8 {offsets = [0, 32], sizes = [128, 32], strides = [1, 1]} : vector<128x128xf32> to vector<128x32xf32>
    %15 = arith.truncf %14 : vector<128x32xf32> to vector<128x32xbf16>
    %c0_11 = arith.constant 0 : index
    %c1 = arith.constant 1 : index
    %c0_12 = arith.constant 0 : index
    %c0_13 = arith.constant 0 : index
    %16 = vector.load %arg5[%c0_11, %c1, %c0_12, %c0_13] : memref<1x4x128x32xbf16, #tpu.memory_space<vmem>>, vector<1x1x128x32xbf16>
    %17 = vector.shape_cast %16 : vector<1x1x128x32xbf16> to vector<128x32xbf16>
    %18 = vector.shape_cast %15 : vector<128x32xbf16> to vector<1x1x128x32xbf16>
    tpu.vector_store %arg5[%c0_11, %c1, %c0_12, %c0_13], %18 {strides = array<i32>} : memref<1x4x128x32xbf16, #tpu.memory_space<vmem>>, vector<1x1x128x32xbf16>,
    %19 = vector.extract_strided_slice %8 {offsets = [0, 64], sizes = [128, 32], strides = [1, 1]} : vector<128x128xf32> to vector<128x32xf32>
    %20 = arith.truncf %19 : vector<128x32xf32> to vector<128x32xbf16>
    %c0_14 = arith.constant 0 : index
    %c2 = arith.constant 2 : index
    %c0_15 = arith.constant 0 : index
    %c0_16 = arith.constant 0 : index
    %21 = vector.load %arg5[%c0_14, %c2, %c0_15, %c0_16] : memref<1x4x128x32xbf16, #tpu.memory_space<vmem>>, vector<1x1x128x32xbf16>
    %22 = vector.shape_cast %21 : vector<1x1x128x32xbf16> to vector<128x32xbf16>
    %23 = vector.shape_cast %20 : vector<128x32xbf16> to vector<1x1x128x32xbf16>
    tpu.vector_store %arg5[%c0_14, %c2, %c0_15, %c0_16], %23 {strides = array<i32>} : memref<1x4x128x32xbf16, #tpu.memory_space<vmem>>, vector<1x1x128x32xbf16>,
    %24 = vector.extract_strided_slice %8 {offsets = [0, 96], sizes = [128, 32], strides = [1, 1]} : vector<128x128xf32> to vector<128x32xf32>
    %25 = arith.truncf %24 : vector<128x32xf32> to vector<128x32xbf16>
    %c0_17 = arith.constant 0 : index
    %c3 = arith.constant 3 : index
    %c0_18 = arith.constant 0 : index
    %c0_19 = arith.constant 0 : index
    %26 = vector.load %arg5[%c0_17, %c3, %c0_18, %c0_19] : memref<1x4x128x32xbf16, #tpu.memory_space<vmem>>, vector<1x1x128x32xbf16>
    %27 = vector.shape_cast %26 : vector<1x1x128x32xbf16> to vector<128x32xbf16>
    %28 = vector.shape_cast %25 : vector<128x32xbf16> to vector<1x1x128x32xbf16>
    tpu.vector_store %arg5[%c0_17, %c3, %c0_18, %c0_19], %28 {strides = array<i32>} : memref<1x4x128x32xbf16, #tpu.memory_space<vmem>>, vector<1x1x128x32xbf16>,
    return
  }
  func.func @transform_0(%arg0: i32, %arg1: i32) -> (i32, i32, i32) {
    %c0_i32 = arith.constant 0 : i32
    %c0_i32_0 = arith.constant 0 : i32
    return %arg0, %arg1, %c0_i32 : i32, i32, i32
  }
  func.func @transform_1(%arg0: i32, %arg1: i32) -> (i32, i32) {
    %c0_i32 = arith.constant 0 : i32
    %c0_i32_0 = arith.constant 0 : i32
    %c0_i32_1 = arith.constant 0 : i32
    return %c0_i32, %c0_i32_0 : i32, i32
  }
  func.func @transform_2(%arg0: i32, %arg1: i32) -> (i32, i32) {
    %c0_i32 = arith.constant 0 : i32
    %c0_i32_0 = arith.constant 0 : i32
    %c0_i32_1 = arith.constant 0 : i32
    return %c0_i32, %c0_i32_0 : i32, i32
  }
  func.func @transform_3(%arg0: i32, %arg1: i32) -> (i32, i32, i32, i32) {
    %c0_i32 = arith.constant 0 : i32
    %c0_i32_0 = arith.constant 0 : i32
    %c0_i32_1 = arith.constant 0 : i32
    return %arg0, %c0_i32, %arg1, %c0_i32_0 : i32, i32, i32, i32
  }
}

</mosaic_0001>

<llo_original>
// kernel: tpu_custom_call.1
$region0: #{tpu_custom_call.1}
  #allocation0 [shape = 'u32[]', space=smem, size = 0x4, offset = 0x4, fixed_abs, tag = 'smem constant byte address 0x4 - core index']
  #allocation1 [shape = 'u32[72,128]{1,0:T(1,128)}', space=vmem, size = 0x9000, scoped, tag = 'internal scratch']
  %s0 = inlined_call_operand.hbm [shape: bf16[2,256,128], index: 0, kind: input, shape index: {}]
  %s1 = inlined_call_operand.hbm [shape: bf16[128,128], index: 1, kind: input, shape index: {}]
  %s2 = inlined_call_operand.vmem [shape: f32[1,128], index: 2, kind: input, shape index: {}]
  %s3 = inlined_call_operand.vmem [shape: bf16[2,4,256,32], index: 3, kind: output, shape index: {}]
  %s4 = sld [smem:[#allocation0]]
  $region90: #{tpu_custom_call.1} parent=0
    _
  %s6 = ssub.s32 1, %s4
  %s7 = scalar_select 0, %s6, %s4
  $region1: #{tpu_custom_call.1} parent=0
    #allocation2 [shape = 'u8[65536]{0}', space=vmem, size = 0x10000, scoped, tag = 'input window, operand 0']
    #allocation3 [shape = 's32[2]{0}', space=sflag, size = 0x8, scoped, tag = 'scoped memory for tpu_custom_call.1']
    #allocation4 [shape = 'u8[32768]{0}', space=vmem, size = 0x8000, scoped, tag = 'input window, operand 1, single buffered']
    #allocation5 [shape = 's32[1]{0}', space=sflag, size = 0x4, scoped, tag = 'scoped memory for tpu_custom_call.1']
    #allocation6 [shape = 'u8[262144]{0}', space=vmem, size = 0x40000, scoped, tag = 'output window, operand 0']
    %8 = vsyncpa [#allocation3], 0
    %s9 = scalar_lea.sflag [#allocation3], 1
    %10 = vsyncpa %s9, 0
    %11 = vsyncpa [#allocation5], 0
    loop: start=0, step=1, limit=6
    $region2: #{tpu_custom_call.1} parent=1 // loop_pre_header
      _
    $region3: #{tpu_custom_call.1} parent=1 // loop_header
      %s13 = sphi 0, %s17
      %p14 = scmp.ge.s32.totalorder %s13, 6
      %s20 = sphi 0, %s32
      %s21 = sphi 0, %s28
      %s22 = sphi 0, %s20
      %s23 = sphi 0, %s21
      %s24 = sphi 0, %s22
      %s25 = sphi 0, %s23
      %s37 = sphi 0, %s39
      %s40 = sphi 0, %s37
      %s41 = sphi 0, %s40
      %s57 = sphi 0, %s41
      %s61 = sphi 0, %s61
      %s63 = sphi 0, %s61
      %s64 = sphi 0, %s63
      %s78 = sphi 0, %s64
      %s82 = sphi 0, %s82
      %s84 = sphi 0, %s82
      %s85 = sphi 0, %s84
      %s99 = sphi 0, %s85
      %s107 = sphi 0, %s109
      %s110 = sphi 0, %s107
      %s111 = sphi 0, %s110
      %s127 = sphi 0, %s111
    $region4: #{tpu_custom_call.1} parent=1 // loop_header_branch
      %16 = sbr.rel (%p14) target = $region8
    $region5: #{tpu_custom_call.1} parent=1 // loop_body
      %s18 = ssub.s32 %s13, 1
      %s19 = ssub.s32 %s13, 2
      %s26 = sadd.s32 1, %s21
      %p27 = scmp.ge.s32.totalorder %s26, 2
      %s28 = scalar_select %p27, 0, %s26
      %s29 = sadd.s32 1, %s20
      %s30 = scalar_select %p27, %s29, %s20
      %p31 = scmp.ge.s32.totalorder %s30, 2
      %s32 = scalar_select %p31, 0, %s30
      %s33 = ssub.s32 %s20, %s32
      %s34 = ssub.s32 %s21, %s28
      %s35 = sor.u32 %s33, %s34
      %p36 = scmp.eq.s32.totalorder %s35, 0
      %s38 = sadd.s32 %s37, 1
      %s39 = scalar_select %p36, %s37, %s38
      %p42 = pneg %p36
      %p43 = scmp.eq.s32.totalorder %s13, 3
      %p44 = por %p42, %p43
      %p45 = scmp.ne.s32.totalorder %s37, %s40
      %p46 = scmp.eq.s32.totalorder %s13, 0
      %p47 = por %p45, %p46
      %p48 = scmp.ne.s32.totalorder %s37, %s40
      %p49 = scmp.eq.s32.totalorder %s18, 3
      %p50 = por %p48, %p49
      %p51 = scmp.ne.s32.totalorder %s40, %s41
      %p52 = scmp.eq.s32.totalorder %s18, 0
      %p53 = por %p51, %p52
      %p54 = scmp.ne.s32.totalorder %s40, %s41
      %p55 = scmp.eq.s32.totalorder %s19, 3
      %p56 = por %p54, %p55
      %p58 = scmp.ne.s32.totalorder %s41, %s57
      %p59 = scmp.eq.s32.totalorder %s19, 0
      %p60 = por %p58, %p59
      %s62 = sadd.s32 %s61, 1
      %p65 = scmp.eq.s32.totalorder %s13, 3
      %p66 = scmp.ne.s32.totalorder %s61, %s63
      %p67 = scmp.eq.s32.totalorder %s13, 0
      %p68 = por %p66, %p67
      %p69 = scmp.ne.s32.totalorder %s61, %s63
      %p70 = scmp.eq.s32.totalorder %s18, 3
      %p71 = por %p69, %p70
      %p72 = scmp.ne.s32.totalorder %s63, %s64
      %p73 = scmp.eq.s32.totalorder %s18, 0
      %p74 = por %p72, %p73
      %p75 = scmp.ne.s32.totalorder %s63, %s64
      %p76 = scmp.eq.s32.totalorder %s19, 3
      %p77 = por %p75, %p76
      %p79 = scmp.ne.s32.totalorder %s64, %s78
      %p80 = scmp.eq.s32.totalorder %s19, 0
      %p81 = por %p79, %p80
      %s83 = sadd.s32 %s82, 1
      %p86 = scmp.eq.s32.totalorder %s13, 3
      %p87 = scmp.ne.s32.totalorder %s82, %s84
      %p88 = scmp.eq.s32.totalorder %s13, 0
      %p89 = por %p87, %p88
      %p90 = scmp.ne.s32.totalorder %s82, %s84
      %p91 = scmp.eq.s32.totalorder %s18, 3
      %p92 = por %p90, %p91
      %p93 = scmp.ne.s32.totalorder %s84, %s85
      %p94 = scmp.eq.s32.totalorder %s18, 0
      %p95 = por %p93, %p94
      %p96 = scmp.ne.s32.totalorder %s84, %s85
      %p97 = scmp.eq.s32.totalorder %s19, 3
      %p98 = por %p96, %p97
      %p100 = scmp.ne.s32.totalorder %s85, %s99
      %p101 = scmp.eq.s32.totalorder %s19, 0
      %p102 = por %p100, %p101
      %s103 = ssub.s32 %s20, %s32
      %s104 = ssub.s32 %s21, %s28
      %s105 = sor.u32 %s103, %s104
      %p106 = scmp.eq.s32.totalorder %s105, 0
      %s108 = sadd.s32 %s107, 1
      %s109 = scalar_select %p106, %s107, %s108
      %p112 = pneg %p106
      %p113 = scmp.eq.s32.totalorder %s13, 3
      %p114 = por %p112, %p113
      %p115 = scmp.ne.s32.totalorder %s107, %s110
      %p116 = scmp.eq.s32.totalorder %s13, 0
      %p117 = por %p115, %p116
      %p118 = scmp.ne.s32.totalorder %s107, %s110
      %p119 = scmp.eq.s32.totalorder %s18, 3
      %p120 = por %p118, %p119
      %p121 = scmp.ne.s32.totalorder %s110, %s111
      %p122 = scmp.eq.s32.totalorder %s18, 0
      %p123 = por %p121, %p122
      %p124 = scmp.ne.s32.totalorder %s110, %s111
      %p125 = scmp.eq.s32.totalorder %s19, 3
      %p126 = por %p124, %p125
      %p128 = scmp.ne.s32.totalorder %s111, %s127
      %p129 = scmp.eq.s32.totalorder %s19, 0
      %p130 = por %p128, %p129
      %p131 = scmp.le.s32.totalorder 1, %s13
      %p132 = scmp.lt.s32.totalorder %s13, 5
      %p133 = pnand %p131, %p132
      %p134 = pneg %p133
      // Predicated region
      $region9: #{tpu_custom_call.1} parent=5 // pred_check
        _
      $region10: #{tpu_custom_call.1} parent=5 // pred_check_branch
        %136 = sbr.rel (%p133) target = $region12
      $region11: #{tpu_custom_call.1} parent=5 // pred_region
        %s137 = ssub.s32 %s13, 1
        // Predicated region
        $region13: #{tpu_custom_call.1} parent=11 // pred_check
          %p138 = pneg %p74
        $region14: #{tpu_custom_call.1} parent=11 // pred_check_branch
          %140 = sbr.rel (%p138) target = $region16
        $region15: #{tpu_custom_call.1} parent=11 // pred_region
          %142 = vsyncadd [#allocation5], 0
          %s143 = sshll.u32 %s1, 4
          %s144 = int_to_ptr.hbm [resolvable:$true] %s143
          %s145 = sshll.u32 [#allocation4], 4
          %s146 = int_to_ptr.vmem [resolvable:$true] %s145
          %151 = dma.hbm_to_vmem [thread:$0]  %s144, 1024, %s146, [#allocation5], 64, 64, 4
        $region16: #{tpu_custom_call.1} parent=11 // pred_fallthru
          _
        // Predicated region
        $region17: #{tpu_custom_call.1} parent=11 // pred_check
          %p152 = pneg %p95
        $region18: #{tpu_custom_call.1} parent=11 // pred_check_branch
          %154 = sbr.rel (%p152) target = $region20
        $region19: #{tpu_custom_call.1} parent=11 // pred_region
          _
        $region20: #{tpu_custom_call.1} parent=11 // pred_fallthru
          _
      $region12: #{tpu_custom_call.1} parent=5 // pred_fallthru
        _
      %p155 = scmp.lt.s32.totalorder %s13, 4
      // Predicated region
      $region21: #{tpu_custom_call.1} parent=5 // pred_check
        %p156 = pneg %p155
      $region22: #{tpu_custom_call.1} parent=5 // pred_check_branch
        %158 = sbr.rel (%p156) target = $region24
      $region23: #{tpu_custom_call.1} parent=5 // pred_region
        // Predicated region
        $region25: #{tpu_custom_call.1} parent=23 // pred_check
          %p159 = pneg %p47
        $region26: #{tpu_custom_call.1} parent=23 // pred_check_branch
          %161 = sbr.rel (%p159) target = $region28
        $region27: #{tpu_custom_call.1} parent=23 // pred_region
          %s162 = sand.u32 %s37, 1
          %s163 = scalar_lea.sflag [#allocation3], %s162
          %s164 = sand.u32 %s37, 1
          %s165 = smul.addr %s164, 64
          %s166 = scalar_lea.vmem [#allocation2], %s165
          %s167 = smul.u32 16, %s21
          %169 = vsyncadd %s163, 0
          %s170 = smul.addr %s20, 32
          %s171 = sadd.s32 %s167, %s170
          %s172 = smul.addr %s171, 4
          %s173 = scalar_lea.hbm %s0, %s172
          %s174 = sshll.u32 %s173, 4
          %s175 = int_to_ptr.hbm [resolvable:$true] %s174
          %s176 = sshll.u32 %s166, 4
          %s177 = int_to_ptr.vmem [resolvable:$true] %s176
          %182 = dma.hbm_to_vmem [thread:$0]  %s175, 1024, %s177, %s163, 64, 64, 4
        $region28: #{tpu_custom_call.1} parent=23 // pred_fallthru
          _
      $region24: #{tpu_custom_call.1} parent=5 // pred_fallthru
        _
      %p183 = scmp.le.s32.totalorder 1, %s13
      %p184 = scmp.lt.s32.totalorder %s13, 5
      %p185 = pnand %p183, %p184
      %p186 = pneg %p185
      // Predicated region
      $region29: #{tpu_custom_call.1} parent=5 // pred_check
        _
      $region30: #{tpu_custom_call.1} parent=5 // pred_check_branch
        %188 = sbr.rel (%p185) target = $region32
      $region31: #{tpu_custom_call.1} parent=5 // pred_region
        %s189 = ssub.s32 %s13, 1
        %s190 = sand.u32 %s40, 1
        %s191 = scalar_lea.sflag [#allocation3], %s190
        %s192 = sand.u32 %s40, 1
        %s193 = smul.addr %s192, 64
        %s194 = scalar_lea.vmem [#allocation2], %s193
        // Predicated region
        $region33: #{tpu_custom_call.1} parent=31 // pred_check
          %p195 = pneg %p53
        $region34: #{tpu_custom_call.1} parent=31 // pred_check_branch
          %197 = sbr.rel (%p195) target = $region36
        $region35: #{tpu_custom_call.1} parent=31 // pred_region
          %199 = dma.done %s191, 1024
        $region36: #{tpu_custom_call.1} parent=31 // pred_fallthru
          _
        // Predicated region
        $region37: #{tpu_custom_call.1} parent=31 // pred_check
          %p200 = pneg %p74
        $region38: #{tpu_custom_call.1} parent=31 // pred_check_branch
          %202 = sbr.rel (%p200) target = $region40
        $region39: #{tpu_custom_call.1} parent=31 // pred_region
          %204 = dma.done [#allocation5], 1024
        $region40: #{tpu_custom_call.1} parent=31 // pred_fallthru
          _
        %s205 = sand.u32 %s40, 1
        %s206 = scalar_lea.sflag [#allocation3], %s205
        %s207 = sand.u32 %s40, 1
        %s208 = smul.addr %s207, 64
        %s209 = scalar_lea.vmem [#allocation2], %s208
        %p210 = pneg %p53
        %p211 = pneg %p50
        %p212 = pneg %p74
        %p213 = pneg %p71
        %p214 = pneg %p95
        %p215 = pneg %p92
        %p216 = pneg %p123
        %p217 = pneg %p120
        %s218 = sand.u32 %s110, 1
        %s219 = sand.u32 %s110, 1
        %s220 = smul.addr %s219, 256
        %s221 = scalar_lea.vmem [#allocation6], %s220
        %s222 = smul.u32 16, %s23
        %s223 = smul.u32 16, %s23
        %v224 = vld [vmem:[%s194] sm:$0xf]
        %v225 = vld [vmem:[%s194 + $0x4] sm:$0xf]
        %v226 = vld [vmem:[%s194 + $0x8] sm:$0xf]
        %v227 = vld [vmem:[%s194 + $0xc] sm:$0xf]
        %v228 = vld [vmem:[%s194 + $0x10] sm:$0xf]
        %v229 = vld [vmem:[%s194 + $0x14] sm:$0xf]
        %v230 = vld [vmem:[%s194 + $0x18] sm:$0xf]
        %v231 = vld [vmem:[%s194 + $0x1c] sm:$0xf]
        %v232 = vld [vmem:[%s194 + $0x20] sm:$0xf]
        %v233 = vld [vmem:[%s194 + $0x24] sm:$0xf]
        %v234 = vld [vmem:[%s194 + $0x28] sm:$0xf]
        %v235 = vld [vmem:[%s194 + $0x2c] sm:$0xf]
        %v236 = vld [vmem:[%s194 + $0x30] sm:$0xf]
        %v237 = vld [vmem:[%s194 + $0x34] sm:$0xf]
        %v238 = vld [vmem:[%s194 + $0x38] sm:$0xf]
        %v239 = vld [vmem:[%s194 + $0x3c] sm:$0xf]
        %v240 = vld [vmem:[#allocation4] sm:$0xf]
        %v241 = vld [vmem:[#allocation4 + $0x4] sm:$0xf]
        %v242 = vld [vmem:[#allocation4 + $0x8] sm:$0xf]
        %v243 = vld [vmem:[#allocation4 + $0xc] sm:$0xf]
        %v244 = vld [vmem:[#allocation4 + $0x10] sm:$0xf]
        %v245 = vld [vmem:[#allocation4 + $0x14] sm:$0xf]
        %v246 = vld [vmem:[#allocation4 + $0x18] sm:$0xf]
        %v247 = vld [vmem:[#allocation4 + $0x1c] sm:$0xf]
        %v248 = vld [vmem:[#allocation4 + $0x20] sm:$0xf]
        %v249 = vld [vmem:[#allocation4 + $0x24] sm:$0xf]
        %v250 = vld [vmem:[#allocation4 + $0x28] sm:$0xf]
        %v251 = vld [vmem:[#allocation4 + $0x2c] sm:$0xf]
        %v252 = vld [vmem:[#allocation4 + $0x30] sm:$0xf]
        %v253 = vld [vmem:[#allocation4 + $0x34] sm:$0xf]
        %v254 = vld [vmem:[#allocation4 + $0x38] sm:$0xf]
        %v255 = vld [vmem:[#allocation4 + $0x3c] sm:$0xf]
        %v256 = vld [vmem:[%s2] sm:$0x1]
        %v258 = vperm.slane %v256, 0
        %v276 = vunpack.c.l.b16 %v224
        %v277 = vunpack.c.l.b16 %v225
        %v278 = vunpack.c.l.b16 %v226
        %v279 = vunpack.c.l.b16 %v227
        %v280 = vunpack.c.l.b16 %v228
        %v281 = vunpack.c.l.b16 %v229
        %v282 = vunpack.c.l.b16 %v230
        %v283 = vunpack.c.l.b16 %v231
        %v284 = vunpack.c.l.b16 %v232
        %v285 = vunpack.c.l.b16 %v233
        %v286 = vunpack.c.l.b16 %v234
        %v287 = vunpack.c.l.b16 %v235
        %v288 = vunpack.c.l.b16 %v236
        %v289 = vunpack.c.l.b16 %v237
        %v290 = vunpack.c.l.b16 %v238
        %v291 = vunpack.c.l.b16 %v239
        %v292 = vpack.c.b16 %v277, %v276
        %v293 = vpack.c.b16 %v279, %v278
        %v294 = vpack.c.b16 %v281, %v280
        %v295 = vpack.c.b16 %v283, %v282
        %v296 = vpack.c.b16 %v285, %v284
        %v297 = vpack.c.b16 %v287, %v286
        %v298 = vpack.c.b16 %v289, %v288
        %v299 = vpack.c.b16 %v291, %v290
        %v324 = vunpack.c.l.b16 %v240
        %v325 = vunpack.c.l.b16 %v241
        %v326 = vunpack.c.l.b16 %v242
        %v327 = vunpack.c.l.b16 %v243
        %v328 = vunpack.c.l.b16 %v244
        %v329 = vunpack.c.l.b16 %v245
        %v330 = vunpack.c.l.b16 %v246
        %v331 = vunpack.c.l.b16 %v247
        %v332 = vunpack.c.l.b16 %v248
        %v333 = vunpack.c.l.b16 %v249
        %v334 = vunpack.c.l.b16 %v250
        %v335 = vunpack.c.l.b16 %v251
        %v336 = vunpack.c.l.b16 %v252
        %v337 = vunpack.c.l.b16 %v253
        %v338 = vunpack.c.l.b16 %v254
        %v339 = vunpack.c.l.b16 %v255
        %v340 = vpack.c.b16 %v325, %v324
        %v341 = vpack.c.b16 %v327, %v326
        %v342 = vpack.c.b16 %v329, %v328
        %v343 = vpack.c.b16 %v331, %v330
        %v344 = vpack.c.b16 %v333, %v332
        %v345 = vpack.c.b16 %v335, %v334
        %v346 = vpack.c.b16 %v337, %v336
        %v347 = vpack.c.b16 %v339, %v338
        %356 = vmatpush.bf16.msra.mxu0 %v347
        %357 = vmatpush.bf16.msra.mxu0 %v346
        %358 = vmatpush.bf16.msra.mxu0 %v345
        %359 = vmatpush.bf16.msra.mxu0 %v344
        %360 = vmatpush.bf16.msra.mxu0 %v343
        %361 = vmatpush.bf16.msra.mxu0 %v342
        %362 = vmatpush.bf16.msra.mxu0 %v341
        %363 = vmatpush.bf16.msra.mxu0 %v340
        %364 = vmatmul.bf16.gmra.mxu0 %v292
        %v365 = vpop.f32.mrf.mxu0
        %v366 = vadd.f32 %v258, %v365
        %v367 = vpop.f32.mrf.mxu0
        %v368 = vadd.f32 %v258, %v367
        %369 = vmatmul.bf16.gmra.mxu0 %v293
        %v370 = vpop.f32.mrf.mxu0
        %v371 = vadd.f32 %v258, %v370
        %v372 = vpop.f32.mrf.mxu0
        %v373 = vadd.f32 %v258, %v372
        %374 = vmatmul.bf16.gmra.mxu0 %v294
        %v375 = vpop.f32.mrf.mxu0
        %v376 = vadd.f32 %v258, %v375
        %v377 = vpop.f32.mrf.mxu0
        %v378 = vadd.f32 %v258, %v377
        %379 = vmatmul.bf16.gmra.mxu0 %v295
        %v380 = vpop.f32.mrf.mxu0
        %v381 = vadd.f32 %v258, %v380
        %v382 = vpop.f32.mrf.mxu0
        %v383 = vadd.f32 %v258, %v382
        %384 = vmatmul.bf16.gmra.mxu0 %v296
        %v385 = vpop.f32.mrf.mxu0
        %v386 = vadd.f32 %v258, %v385
        %v387 = vpop.f32.mrf.mxu0
        %v388 = vadd.f32 %v258, %v387
        %389 = vmatmul.bf16.gmra.mxu0 %v297
        %v390 = vpop.f32.mrf.mxu0
        %v391 = vadd.f32 %v258, %v390
        %v392 = vpop.f32.mrf.mxu0
        %v393 = vadd.f32 %v258, %v392
        %394 = vmatmul.bf16.gmra.mxu0 %v298
        %v395 = vpop.f32.mrf.mxu0
        %v396 = vadd.f32 %v258, %v395
        %v397 = vpop.f32.mrf.mxu0
        %v398 = vadd.f32 %v258, %v397
        %399 = vmatmul.bf16.gmra.mxu0 %v299
        %v400 = vpop.f32.mrf.mxu0
        %v401 = vadd.f32 %v258, %v400
        %v402 = vpop.f32.mrf.mxu0
        %v403 = vadd.f32 %v258, %v402
        %404 = vdwg.mxu0
        %v405 = vmul.f32 %v366, 0.17677669
        %v406 = vmul.f32 %v368, 0.17677669
        %v407 = vmul.f32 %v371, 0.17677669
        %v408 = vmul.f32 %v373, 0.17677669
        %v409 = vmul.f32 %v376, 0.17677669
        %v410 = vmul.f32 %v378, 0.17677669
        %v411 = vmul.f32 %v381, 0.17677669
        %v412 = vmul.f32 %v383, 0.17677669
        %v413 = vmul.f32 %v386, 0.17677669
        %v414 = vmul.f32 %v388, 0.17677669
        %v415 = vmul.f32 %v391, 0.17677669
        %v416 = vmul.f32 %v393, 0.17677669
        %v417 = vmul.f32 %v396, 0.17677669
        %v418 = vmul.f32 %v398, 0.17677669
        %v419 = vmul.f32 %v401, 0.17677669
        %v420 = vmul.f32 %v403, 0.17677669
        %v421 = vpack.c.bf16 %v405, %v405
        %v422 = vpack.c.bf16 %v406, %v406
        %v423 = vpack.c.bf16 %v407, %v407
        %v424 = vpack.c.bf16 %v408, %v408
        %v425 = vpack.c.bf16 %v409, %v409
        %v426 = vpack.c.bf16 %v410, %v410
        %v427 = vpack.c.bf16 %v411, %v411
        %v428 = vpack.c.bf16 %v412, %v412
        %v429 = vpack.c.bf16 %v413, %v413
        %v430 = vpack.c.bf16 %v414, %v414
        %v431 = vpack.c.bf16 %v415, %v415
        %v432 = vpack.c.bf16 %v416, %v416
        %v433 = vpack.c.bf16 %v417, %v417
        %v434 = vpack.c.bf16 %v418, %v418
        %v435 = vpack.c.bf16 %v419, %v419
        %v436 = vpack.c.bf16 %v420, %v420
        %vm437 = vcmask 257024
        %438 = vst.msk [vmem:[%s221] sm:$0xf] %vm437, %v421
        %439 = vst.msk [vmem:[%s221 + $0x4] sm:$0xf] %vm437, %v422
        %440 = vst.msk [vmem:[%s221 + $0x8] sm:$0xf] %vm437, %v423
        %441 = vst.msk [vmem:[%s221 + $0xc] sm:$0xf] %vm437, %v424
        %442 = vst.msk [vmem:[%s221 + $0x10] sm:$0xf] %vm437, %v425
        %443 = vst.msk [vmem:[%s221 + $0x14] sm:$0xf] %vm437, %v426
        %444 = vst.msk [vmem:[%s221 + $0x18] sm:$0xf] %vm437, %v427
        %445 = vst.msk [vmem:[%s221 + $0x1c] sm:$0xf] %vm437, %v428
        %446 = vst.msk [vmem:[%s221 + $0x20] sm:$0xf] %vm437, %v429
        %447 = vst.msk [vmem:[%s221 + $0x24] sm:$0xf] %vm437, %v430
        %448 = vst.msk [vmem:[%s221 + $0x28] sm:$0xf] %vm437, %v431
        %449 = vst.msk [vmem:[%s221 + $0x2c] sm:$0xf] %vm437, %v432
        %450 = vst.msk [vmem:[%s221 + $0x30] sm:$0xf] %vm437, %v433
        %451 = vst.msk [vmem:[%s221 + $0x34] sm:$0xf] %vm437, %v434
        %452 = vst.msk [vmem:[%s221 + $0x38] sm:$0xf] %vm437, %v435
        %453 = vst.msk [vmem:[%s221 + $0x3c] sm:$0xf] %vm437, %v436
        %470 = vrot.lane.b32.xlu0 %v421, 96
        %v471 = vpop.permute.xlu0 %470
        %472 = vrot.lane.b32.xlu0 %v422, 96
        %v473 = vpop.permute.xlu0 %472
        %474 = vrot.lane.b32.xlu0 %v423, 96
        %v475 = vpop.permute.xlu0 %474
        %476 = vrot.lane.b32.xlu0 %v424, 96
        %v477 = vpop.permute.xlu0 %476
        %478 = vrot.lane.b32.xlu0 %v425, 96
        %v479 = vpop.permute.xlu0 %478
        %480 = vrot.lane.b32.xlu0 %v426, 96
        %v481 = vpop.permute.xlu0 %480
        %482 = vrot.lane.b32.xlu0 %v427, 96
        %v483 = vpop.permute.xlu0 %482
        %484 = vrot.lane.b32.xlu0 %v428, 96
        %v485 = vpop.permute.xlu0 %484
        %486 = vrot.lane.b32.xlu0 %v429, 96
        %v487 = vpop.permute.xlu0 %486
        %488 = vrot.lane.b32.xlu0 %v430, 96
        %v489 = vpop.permute.xlu0 %488
        %490 = vrot.lane.b32.xlu0 %v431, 96
        %v491 = vpop.permute.xlu0 %490
        %492 = vrot.lane.b32.xlu0 %v432, 96
        %v493 = vpop.permute.xlu0 %492
        %494 = vrot.lane.b32.xlu0 %v433, 96
        %v495 = vpop.permute.xlu0 %494
        %496 = vrot.lane.b32.xlu0 %v434, 96
        %v497 = vpop.permute.xlu0 %496
        %498 = vrot.lane.b32.xlu0 %v435, 96
        %v499 = vpop.permute.xlu0 %498
        %500 = vrot.lane.b32.xlu0 %v436, 96
        %v501 = vpop.permute.xlu0 %500
        %s518 = scalar_lea.vmem %s221, 64 [#allocation6]
        %519 = vst.msk [vmem:[%s518] sm:$0xf] %vm437, %v471
        %520 = vst.msk [vmem:[%s518 + $0x4] sm:$0xf] %vm437, %v473
        %521 = vst.msk [vmem:[%s518 + $0x8] sm:$0xf] %vm437, %v475
        %522 = vst.msk [vmem:[%s518 + $0xc] sm:$0xf] %vm437, %v477
        %523 = vst.msk [vmem:[%s518 + $0x10] sm:$0xf] %vm437, %v479
        %524 = vst.msk [vmem:[%s518 + $0x14] sm:$0xf] %vm437, %v481
        %525 = vst.msk [vmem:[%s518 + $0x18] sm:$0xf] %vm437, %v483
        %526 = vst.msk [vmem:[%s518 + $0x1c] sm:$0xf] %vm437, %v485
        %527 = vst.msk [vmem:[%s518 + $0x20] sm:$0xf] %vm437, %v487
        %528 = vst.msk [vmem:[%s518 + $0x24] sm:$0xf] %vm437, %v489
        %529 = vst.msk [vmem:[%s518 + $0x28] sm:$0xf] %vm437, %v491
        %530 = vst.msk [vmem:[%s518 + $0x2c] sm:$0xf] %vm437, %v493
        %531 = vst.msk [vmem:[%s518 + $0x30] sm:$0xf] %vm437, %v495
        %532 = vst.msk [vmem:[%s518 + $0x34] sm:$0xf] %vm437, %v497
        %533 = vst.msk [vmem:[%s518 + $0x38] sm:$0xf] %vm437, %v499
        %534 = vst.msk [vmem:[%s518 + $0x3c] sm:$0xf] %vm437, %v501
        %535 = vrot.lane.b32.xlu0 %v421, 64
        %v536 = vpop.permute.xlu0 %535
        %537 = vrot.lane.b32.xlu0 %v422, 64
        %v538 = vpop.permute.xlu0 %537
        %539 = vrot.lane.b32.xlu0 %v423, 64
        %v540 = vpop.permute.xlu0 %539
        %541 = vrot.lane.b32.xlu0 %v424, 64
        %v542 = vpop.permute.xlu0 %541
        %543 = vrot.lane.b32.xlu0 %v425, 64
        %v544 = vpop.permute.xlu0 %543
        %545 = vrot.lane.b32.xlu0 %v426, 64
        %v546 = vpop.permute.xlu0 %545
        %547 = vrot.lane.b32.xlu0 %v427, 64
        %v548 = vpop.permute.xlu0 %547
        %549 = vrot.lane.b32.xlu0 %v428, 64
        %v550 = vpop.permute.xlu0 %549
        %551 = vrot.lane.b32.xlu0 %v429, 64
        %v552 = vpop.permute.xlu0 %551
        %553 = vrot.lane.b32.xlu0 %v430, 64
        %v554 = vpop.permute.xlu0 %553
        %555 = vrot.lane.b32.xlu0 %v431, 64
        %v556 = vpop.permute.xlu0 %555
        %557 = vrot.lane.b32.xlu0 %v432, 64
        %v558 = vpop.permute.xlu0 %557
        %559 = vrot.lane.b32.xlu0 %v433, 64
        %v560 = vpop.permute.xlu0 %559
        %561 = vrot.lane.b32.xlu0 %v434, 64
        %v562 = vpop.permute.xlu0 %561
        %563 = vrot.lane.b32.xlu0 %v435, 64
        %v564 = vpop.permute.xlu0 %563
        %565 = vrot.lane.b32.xlu0 %v436, 64
        %v566 = vpop.permute.xlu0 %565
        %s583 = scalar_lea.vmem %s221, 128 [#allocation6]
        %584 = vst.msk [vmem:[%s583] sm:$0xf] %vm437, %v536
        %585 = vst.msk [vmem:[%s583 + $0x4] sm:$0xf] %vm437, %v538
        %586 = vst.msk [vmem:[%s583 + $0x8] sm:$0xf] %vm437, %v540
        %587 = vst.msk [vmem:[%s583 + $0xc] sm:$0xf] %vm437, %v542
        %588 = vst.msk [vmem:[%s583 + $0x10] sm:$0xf] %vm437, %v544
        %589 = vst.msk [vmem:[%s583 + $0x14] sm:$0xf] %vm437, %v546
        %590 = vst.msk [vmem:[%s583 + $0x18] sm:$0xf] %vm437, %v548
        %591 = vst.msk [vmem:[%s583 + $0x1c] sm:$0xf] %vm437, %v550
        %592 = vst.msk [vmem:[%s583 + $0x20] sm:$0xf] %vm437, %v552
        %593 = vst.msk [vmem:[%s583 + $0x24] sm:$0xf] %vm437, %v554
        %594 = vst.msk [vmem:[%s583 + $0x28] sm:$0xf] %vm437, %v556
        %595 = vst.msk [vmem:[%s583 + $0x2c] sm:$0xf] %vm437, %v558
        %596 = vst.msk [vmem:[%s583 + $0x30] sm:$0xf] %vm437, %v560
        %597 = vst.msk [vmem:[%s583 + $0x34] sm:$0xf] %vm437, %v562
        %598 = vst.msk [vmem:[%s583 + $0x38] sm:$0xf] %vm437, %v564
        %599 = vst.msk [vmem:[%s583 + $0x3c] sm:$0xf] %vm437, %v566
        %600 = vrot.lane.b32.xlu0 %v421, 32
        %v601 = vpop.permute.xlu0 %600
        %602 = vrot.lane.b32.xlu0 %v422, 32
        %v603 = vpop.permute.xlu0 %602
        %604 = vrot.lane.b32.xlu0 %v423, 32
        %v605 = vpop.permute.xlu0 %604
        %606 = vrot.lane.b32.xlu0 %v424, 32
        %v607 = vpop.permute.xlu0 %606
        %608 = vrot.lane.b32.xlu0 %v425, 32
        %v609 = vpop.permute.xlu0 %608
        %610 = vrot.lane.b32.xlu0 %v426, 32
        %v611 = vpop.permute.xlu0 %610
        %612 = vrot.lane.b32.xlu0 %v427, 32
        %v613 = vpop.permute.xlu0 %612
        %614 = vrot.lane.b32.xlu0 %v428, 32
        %v615 = vpop.permute.xlu0 %614
        %616 = vrot.lane.b32.xlu0 %v429, 32
        %v617 = vpop.permute.xlu0 %616
        %618 = vrot.lane.b32.xlu0 %v430, 32
        %v619 = vpop.permute.xlu0 %618
        %620 = vrot.lane.b32.xlu0 %v431, 32
        %v621 = vpop.permute.xlu0 %620
        %622 = vrot.lane.b32.xlu0 %v432, 32
        %v623 = vpop.permute.xlu0 %622
        %624 = vrot.lane.b32.xlu0 %v433, 32
        %v625 = vpop.permute.xlu0 %624
        %626 = vrot.lane.b32.xlu0 %v434, 32
        %v627 = vpop.permute.xlu0 %626
        %628 = vrot.lane.b32.xlu0 %v435, 32
        %v629 = vpop.permute.xlu0 %628
        %630 = vrot.lane.b32.xlu0 %v436, 32
        %v631 = vpop.permute.xlu0 %630
        %s648 = scalar_lea.vmem %s221, 192 [#allocation6]
        %649 = vst.msk [vmem:[%s648] sm:$0xf] %vm437, %v601
        %650 = vst.msk [vmem:[%s648 + $0x4] sm:$0xf] %vm437, %v603
        %651 = vst.msk [vmem:[%s648 + $0x8] sm:$0xf] %vm437, %v605
        %652 = vst.msk [vmem:[%s648 + $0xc] sm:$0xf] %vm437, %v607
        %653 = vst.msk [vmem:[%s648 + $0x10] sm:$0xf] %vm437, %v609
        %654 = vst.msk [vmem:[%s648 + $0x14] sm:$0xf] %vm437, %v611
        %655 = vst.msk [vmem:[%s648 + $0x18] sm:$0xf] %vm437, %v613
        %656 = vst.msk [vmem:[%s648 + $0x1c] sm:$0xf] %vm437, %v615
        %657 = vst.msk [vmem:[%s648 + $0x20] sm:$0xf] %vm437, %v617
        %658 = vst.msk [vmem:[%s648 + $0x24] sm:$0xf] %vm437, %v619
        %659 = vst.msk [vmem:[%s648 + $0x28] sm:$0xf] %vm437, %v621
        %660 = vst.msk [vmem:[%s648 + $0x2c] sm:$0xf] %vm437, %v623
        %661 = vst.msk [vmem:[%s648 + $0x30] sm:$0xf] %vm437, %v625
        %662 = vst.msk [vmem:[%s648 + $0x34] sm:$0xf] %vm437, %v627
        %663 = vst.msk [vmem:[%s648 + $0x38] sm:$0xf] %vm437, %v629
        %664 = vst.msk [vmem:[%s648 + $0x3c] sm:$0xf] %vm437, %v631
        %s665 = sand.u32 %s110, 1
        %s666 = sand.u32 %s110, 1
        %s667 = smul.addr %s666, 256
        %s668 = scalar_lea.vmem [#allocation6], %s667
        // Predicated region
        $region41: #{tpu_custom_call.1} parent=31 // pred_check
          %p669 = pneg %p120
        $region42: #{tpu_custom_call.1} parent=31 // pred_check_branch
          %671 = sbr.rel (%p669) target = $region44
        $region43: #{tpu_custom_call.1} parent=31 // pred_region
          %s672 = smul.u32 16, %s23
          %s673 = smul.addr %s22, 128
          %s674 = sadd.s32 %s672, %s673
          %s675 = smul.addr %s674, 4
          %s676 = scalar_lea.vmem %s3, %s675
          // Predicated region
          $region45: #{tpu_custom_call.1} parent=43 // pred_check
            _
          $region46: #{tpu_custom_call.1} parent=43 // pred_check_branch
            %678 = sbr.rel (0) target = $region48
          $region47: #{tpu_custom_call.1} parent=43 // pred_region
            // Predicated region
            $region49: #{tpu_custom_call.1} parent=47 // pred_check
              _
            $region50: #{tpu_custom_call.1} parent=47 // pred_check_branch
              %680 = sbr.rel target = $region52
            $region51: #{tpu_custom_call.1} parent=47 // pred_region
              // Predicated region
              $region64: #{tpu_custom_call.1} parent=51 // pred_check
                _
              $region65: #{tpu_custom_call.1} parent=51 // pred_check_branch
                %822 = sbr.rel (0) target = $region67
              $region66: #{tpu_custom_call.1} parent=51 // pred_region
                loop: start=0, step=1, limit=1
                $region68: #{tpu_custom_call.1} parent=66 // loop_pre_header
                  _
                $region69: #{tpu_custom_call.1} parent=66 // loop_header
                  %s824 = sphi 0, %s828
                  %p825 = scmp.ge.s32.totalorder %s824, 1
                  %s829 = sphi %s668, %s668
                  %s830 = sphi %s676, %s676
                $region70: #{tpu_custom_call.1} parent=66 // loop_header_branch
                  %827 = sbr.rel (%p825) target = $region74
                $region71: #{tpu_custom_call.1} parent=66 // loop_body
                  _
                $region72: #{tpu_custom_call.1} parent=66 // loop_footer
                  %s828 = sadd.s32 1, %s824
                $region73: #{tpu_custom_call.1} parent=66 // loop_footer_branch
                  %823 = sbr.rel target = $region69
                $region74: #{tpu_custom_call.1} parent=66 // loop_exit
                  _
                %s832 = ssub.s32 16, 1
                loop: start=0, step=1, limit=1
                $region75: #{tpu_custom_call.1} parent=66 // loop_pre_header
                  _
                $region76: #{tpu_custom_call.1} parent=66 // loop_header
                  %s834 = sphi 0, %s838
                  %p835 = scmp.ge.s32.totalorder %s834, 1
                  %s839 = sphi %s668, %s668
                  %s840 = sphi %s676, %s676
                $region77: #{tpu_custom_call.1} parent=66 // loop_header_branch
                  %837 = sbr.rel (%p835) target = $region81
                $region78: #{tpu_custom_call.1} parent=66 // loop_body
                  %v841 = vld [vmem:[%s839] sm:%s832]
                  %842 = vst [vmem:[%s840] sm:%s832] %v841
                  %v843 = vld [vmem:[%s839 + $0x4] sm:%s832]
                  %844 = vst [vmem:[%s840 + $0x4] sm:%s832] %v843
                  %v845 = vld [vmem:[%s839 + $0x8] sm:%s832]
                  %846 = vst [vmem:[%s840 + $0x8] sm:%s832] %v845
                  %v847 = vld [vmem:[%s839 + $0xc] sm:%s832]
                  %848 = vst [vmem:[%s840 + $0xc] sm:%s832] %v847
                  %v849 = vld [vmem:[%s839 + $0x10] sm:%s832]
                  %850 = vst [vmem:[%s840 + $0x10] sm:%s832] %v849
                  %v851 = vld [vmem:[%s839 + $0x14] sm:%s832]
                  %852 = vst [vmem:[%s840 + $0x14] sm:%s832] %v851
                  %v853 = vld [vmem:[%s839 + $0x18] sm:%s832]
                  %854 = vst [vmem:[%s840 + $0x18] sm:%s832] %v853
                  %v855 = vld [vmem:[%s839 + $0x1c] sm:%s832]
                  %856 = vst [vmem:[%s840 + $0x1c] sm:%s832] %v855
                  %v857 = vld [vmem:[%s839 + $0x20] sm:%s832]
                  %858 = vst [vmem:[%s840 + $0x20] sm:%s832] %v857
                  %v859 = vld [vmem:[%s839 + $0x24] sm:%s832]
                  %860 = vst [vmem:[%s840 + $0x24] sm:%s832] %v859
                  %v861 = vld [vmem:[%s839 + $0x28] sm:%s832]
                  %862 = vst [vmem:[%s840 + $0x28] sm:%s832] %v861
                  %v863 = vld [vmem:[%s839 + $0x2c] sm:%s832]
                  %864 = vst [vmem:[%s840 + $0x2c] sm:%s832] %v863
                  %v865 = vld [vmem:[%s839 + $0x30] sm:%s832]
                  %866 = vst [vmem:[%s840 + $0x30] sm:%s832] %v865
                  %v867 = vld [vmem:[%s839 + $0x34] sm:%s832]
                  %868 = vst [vmem:[%s840 + $0x34] sm:%s832] %v867
                  %v869 = vld [vmem:[%s839 + $0x38] sm:%s832]
                  %870 = vst [vmem:[%s840 + $0x38] sm:%s832] %v869
                  %v871 = vld [vmem:[%s839 + $0x3c] sm:%s832]
                  %872 = vst [vmem:[%s840 + $0x3c] sm:%s832] %v871
                  %v873 = vld [vmem:[%s839 + $0x40] sm:%s832]
                  %874 = vst [vmem:[%s840 + $0x80] sm:%s832] %v873
                  %v875 = vld [vmem:[%s839 + $0x44] sm:%s832]
                  %876 = vst [vmem:[%s840 + $0x84] sm:%s832] %v875
                  %v877 = vld [vmem:[%s839 + $0x48] sm:%s832]
                  %878 = vst [vmem:[%s840 + $0x88] sm:%s832] %v877
                  %v879 = vld [vmem:[%s839 + $0x4c] sm:%s832]
                  %880 = vst [vmem:[%s840 + $0x8c] sm:%s832] %v879
                  %v881 = vld [vmem:[%s839 + $0x50] sm:%s832]
                  %882 = vst [vmem:[%s840 + $0x90] sm:%s832] %v881
                  %v883 = vld [vmem:[%s839 + $0x54] sm:%s832]
                  %884 = vst [vmem:[%s840 + $0x94] sm:%s832] %v883
                  %v885 = vld [vmem:[%s839 + $0x58] sm:%s832]
                  %886 = vst [vmem:[%s840 + $0x98] sm:%s832] %v885
                  %v887 = vld [vmem:[%s839 + $0x5c] sm:%s832]
                  %888 = vst [vmem:[%s840 + $0x9c] sm:%s832] %v887
                  %v889 = vld [vmem:[%s839 + $0x60] sm:%s832]
                  %890 = vst [vmem:[%s840 + $0xa0] sm:%s832] %v889
                  %v891 = vld [vmem:[%s839 + $0x64] sm:%s832]
                  %892 = vst [vmem:[%s840 + $0xa4] sm:%s832] %v891
                  %v893 = vld [vmem:[%s839 + $0x68] sm:%s832]
                  %894 = vst [vmem:[%s840 + $0xa8] sm:%s832] %v893
                  %v895 = vld [vmem:[%s839 + $0x6c] sm:%s832]
                  %896 = vst [vmem:[%s840 + $0xac] sm:%s832] %v895
                  %v897 = vld [vmem:[%s839 + $0x70] sm:%s832]
                  %898 = vst [vmem:[%s840 + $0xb0] sm:%s832] %v897
                  %v899 = vld [vmem:[%s839 + $0x74] sm:%s832]
                  %900 = vst [vmem:[%s840 + $0xb4] sm:%s832] %v899
                  %v901 = vld [vmem:[%s839 + $0x78] sm:%s832]
                  %902 = vst [vmem:[%s840 + $0xb8] sm:%s832] %v901
                  %v903 = vld [vmem:[%s839 + $0x7c] sm:%s832]
                  %904 = vst [vmem:[%s840 + $0xbc] sm:%s832] %v903
                  %v905 = vld [vmem:[%s839 + $0x80] sm:%s832]
                  %906 = vst [vmem:[%s840 + $0x100] sm:%s832] %v905
                  %v907 = vld [vmem:[%s839 + $0x84] sm:%s832]
                  %908 = vst [vmem:[%s840 + $0x104] sm:%s832] %v907
                  %v909 = vld [vmem:[%s839 + $0x88] sm:%s832]
                  %910 = vst [vmem:[%s840 + $0x108] sm:%s832] %v909
                  %v911 = vld [vmem:[%s839 + $0x8c] sm:%s832]
                  %912 = vst [vmem:[%s840 + $0x10c] sm:%s832] %v911
                  %v913 = vld [vmem:[%s839 + $0x90] sm:%s832]
                  %914 = vst [vmem:[%s840 + $0x110] sm:%s832] %v913
                  %v915 = vld [vmem:[%s839 + $0x94] sm:%s832]
                  %916 = vst [vmem:[%s840 + $0x114] sm:%s832] %v915
                  %v917 = vld [vmem:[%s839 + $0x98] sm:%s832]
                  %918 = vst [vmem:[%s840 + $0x118] sm:%s832] %v917
                  %v919 = vld [vmem:[%s839 + $0x9c] sm:%s832]
                  %920 = vst [vmem:[%s840 + $0x11c] sm:%s832] %v919
                  %v921 = vld [vmem:[%s839 + $0xa0] sm:%s832]
                  %922 = vst [vmem:[%s840 + $0x120] sm:%s832] %v921
                  %v923 = vld [vmem:[%s839 + $0xa4] sm:%s832]
                  %924 = vst [vmem:[%s840 + $0x124] sm:%s832] %v923
                  %v925 = vld [vmem:[%s839 + $0xa8] sm:%s832]
                  %926 = vst [vmem:[%s840 + $0x128] sm:%s832] %v925
                  %v927 = vld [vmem:[%s839 + $0xac] sm:%s832]
                  %928 = vst [vmem:[%s840 + $0x12c] sm:%s832] %v927
                  %v929 = vld [vmem:[%s839 + $0xb0] sm:%s832]
                  %930 = vst [vmem:[%s840 + $0x130] sm:%s832] %v929
                  %v931 = vld [vmem:[%s839 + $0xb4] sm:%s832]
                  %932 = vst [vmem:[%s840 + $0x134] sm:%s832] %v931
                  %v933 = vld [vmem:[%s839 + $0xb8] sm:%s832]
                  %934 = vst [vmem:[%s840 + $0x138] sm:%s832] %v933
                  %v935 = vld [vmem:[%s839 + $0xbc] sm:%s832]
                  %936 = vst [vmem:[%s840 + $0x13c] sm:%s832] %v935
                  %v937 = vld [vmem:[%s839 + $0xc0] sm:%s832]
                  %938 = vst [vmem:[%s840 + $0x180] sm:%s832] %v937
                  %v939 = vld [vmem:[%s839 + $0xc4] sm:%s832]
                  %940 = vst [vmem:[%s840 + $0x184] sm:%s832] %v939
                  %v941 = vld [vmem:[%s839 + $0xc8] sm:%s832]
                  %942 = vst [vmem:[%s840 + $0x188] sm:%s832] %v941
                  %v943 = vld [vmem:[%s839 + $0xcc] sm:%s832]
                  %944 = vst [vmem:[%s840 + $0x18c] sm:%s832] %v943
                  %v945 = vld [vmem:[%s839 + $0xd0] sm:%s832]
                  %946 = vst [vmem:[%s840 + $0x190] sm:%s832] %v945
                  %v947 = vld [vmem:[%s839 + $0xd4] sm:%s832]
                  %948 = vst [vmem:[%s840 + $0x194] sm:%s832] %v947
                  %v949 = vld [vmem:[%s839 + $0xd8] sm:%s832]
                  %950 = vst [vmem:[%s840 + $0x198] sm:%s832] %v949
                  %v951 = vld [vmem:[%s839 + $0xdc] sm:%s832]
                  %952 = vst [vmem:[%s840 + $0x19c] sm:%s832] %v951
                  %v953 = vld [vmem:[%s839 + $0xe0] sm:%s832]
                  %954 = vst [vmem:[%s840 + $0x1a0] sm:%s832] %v953
                  %v955 = vld [vmem:[%s839 + $0xe4] sm:%s832]
                  %956 = vst [vmem:[%s840 + $0x1a4] sm:%s832] %v955
                  %v957 = vld [vmem:[%s839 + $0xe8] sm:%s832]
                  %958 = vst [vmem:[%s840 + $0x1a8] sm:%s832] %v957
                  %v959 = vld [vmem:[%s839 + $0xec] sm:%s832]
                  %960 = vst [vmem:[%s840 + $0x1ac] sm:%s832] %v959
                  %v961 = vld [vmem:[%s839 + $0xf0] sm:%s832]
                  %962 = vst [vmem:[%s840 + $0x1b0] sm:%s832] %v961
                  %v963 = vld [vmem:[%s839 + $0xf4] sm:%s832]
                  %964 = vst [vmem:[%s840 + $0x1b4] sm:%s832] %v963
                  %v965 = vld [vmem:[%s839 + $0xf8] sm:%s832]
                  %966 = vst [vmem:[%s840 + $0x1b8] sm:%s832] %v965
                  %v967 = vld [vmem:[%s839 + $0xfc] sm:%s832]
                  %968 = vst [vmem:[%s840 + $0x1bc] sm:%s832] %v967
                $region79: #{tpu_custom_call.1} parent=66 // loop_footer
                  %s838 = sadd.s32 1, %s834
                $region80: #{tpu_custom_call.1} parent=66 // loop_footer_branch
                  %833 = sbr.rel target = $region76
                $region81: #{tpu_custom_call.1} parent=66 // loop_exit
                  _
              $region67: #{tpu_custom_call.1} parent=51 // pred_fallthru
                _
            $region52: #{tpu_custom_call.1} parent=47 // pred_fallthru
              _
            // Predicated region
            $region53: #{tpu_custom_call.1} parent=47 // pred_check
              _
            $region54: #{tpu_custom_call.1} parent=47 // pred_check_branch
              %682 = sbr.rel (0) target = $region56
            $region55: #{tpu_custom_call.1} parent=47 // pred_region
              %s684 = ssub.s32 16, 1
              loop: start=0, step=1, limit=1
              $region57: #{tpu_custom_call.1} parent=55 // loop_pre_header
                _
              $region58: #{tpu_custom_call.1} parent=55 // loop_header
                %s686 = sphi 0, %s690
                %p687 = scmp.ge.s32.totalorder %s686, 1
                %s691 = sphi %s668, %s668
                %s692 = sphi %s676, %s676
              $region59: #{tpu_custom_call.1} parent=55 // loop_header_branch
                %689 = sbr.rel (%p687) target = $region63
              $region60: #{tpu_custom_call.1} parent=55 // loop_body
                %v693 = vld [vmem:[%s691] sm:%s684]
                %694 = vst [vmem:[%s692] sm:%s684] %v693
                %v695 = vld [vmem:[%s691 + $0x4] sm:%s684]
                %696 = vst [vmem:[%s692 + $0x4] sm:%s684] %v695
                %v697 = vld [vmem:[%s691 + $0x8] sm:%s684]
                %698 = vst [vmem:[%s692 + $0x8] sm:%s684] %v697
                %v699 = vld [vmem:[%s691 + $0xc] sm:%s684]
                %700 = vst [vmem:[%s692 + $0xc] sm:%s684] %v699
                %v701 = vld [vmem:[%s691 + $0x10] sm:%s684]
                %702 = vst [vmem:[%s692 + $0x10] sm:%s684] %v701
                %v703 = vld [vmem:[%s691 + $0x14] sm:%s684]
                %704 = vst [vmem:[%s692 + $0x14] sm:%s684] %v703
                %v705 = vld [vmem:[%s691 + $0x18] sm:%s684]
                %706 = vst [vmem:[%s692 + $0x18] sm:%s684] %v705
                %v707 = vld [vmem:[%s691 + $0x1c] sm:%s684]
                %708 = vst [vmem:[%s692 + $0x1c] sm:%s684] %v707
                %v709 = vld [vmem:[%s691 + $0x20] sm:%s684]
                %710 = vst [vmem:[%s692 + $0x20] sm:%s684] %v709
                %v711 = vld [vmem:[%s691 + $0x24] sm:%s684]
                %712 = vst [vmem:[%s692 + $0x24] sm:%s684] %v711
                %v713 = vld [vmem:[%s691 + $0x28] sm:%s684]
                %714 = vst [vmem:[%s692 + $0x28] sm:%s684] %v713
                %v715 = vld [vmem:[%s691 + $0x2c] sm:%s684]
                %716 = vst [vmem:[%s692 + $0x2c] sm:%s684] %v715
                %v717 = vld [vmem:[%s691 + $0x30] sm:%s684]
                %718 = vst [vmem:[%s692 + $0x30] sm:%s684] %v717
                %v719 = vld [vmem:[%s691 + $0x34] sm:%s684]
                %720 = vst [vmem:[%s692 + $0x34] sm:%s684] %v719
                %v721 = vld [vmem:[%s691 + $0x38] sm:%s684]
                %722 = vst [vmem:[%s692 + $0x38] sm:%s684] %v721
                %v723 = vld [vmem:[%s691 + $0x3c] sm:%s684]
                %724 = vst [vmem:[%s692 + $0x3c] sm:%s684] %v723
                %v725 = vld [vmem:[%s691 + $0x40] sm:%s684]
                %726 = vst [vmem:[%s692 + $0x80] sm:%s684] %v725
                %v727 = vld [vmem:[%s691 + $0x44] sm:%s684]
                %728 = vst [vmem:[%s692 + $0x84] sm:%s684] %v727
                %v729 = vld [vmem:[%s691 + $0x48] sm:%s684]
                %730 = vst [vmem:[%s692 + $0x88] sm:%s684] %v729
                %v731 = vld [vmem:[%s691 + $0x4c] sm:%s684]
                %732 = vst [vmem:[%s692 + $0x8c] sm:%s684] %v731
                %v733 = vld [vmem:[%s691 + $0x50] sm:%s684]
                %734 = vst [vmem:[%s692 + $0x90] sm:%s684] %v733
                %v735 = vld [vmem:[%s691 + $0x54] sm:%s684]
                %736 = vst [vmem:[%s692 + $0x94] sm:%s684] %v735
                %v737 = vld [vmem:[%s691 + $0x58] sm:%s684]
                %738 = vst [vmem:[%s692 + $0x98] sm:%s684] %v737
                %v739 = vld [vmem:[%s691 + $0x5c] sm:%s684]
                %740 = vst [vmem:[%s692 + $0x9c] sm:%s684] %v739
                %v741 = vld [vmem:[%s691 + $0x60] sm:%s684]
                %742 = vst [vmem:[%s692 + $0xa0] sm:%s684] %v741
                %v743 = vld [vmem:[%s691 + $0x64] sm:%s684]
                %744 = vst [vmem:[%s692 + $0xa4] sm:%s684] %v743
                %v745 = vld [vmem:[%s691 + $0x68] sm:%s684]
                %746 = vst [vmem:[%s692 + $0xa8] sm:%s684] %v745
                %v747 = vld [vmem:[%s691 + $0x6c] sm:%s684]
                %748 = vst [vmem:[%s692 + $0xac] sm:%s684] %v747
                %v749 = vld [vmem:[%s691 + $0x70] sm:%s684]
                %750 = vst [vmem:[%s692 + $0xb0] sm:%s684] %v749
                %v751 = vld [vmem:[%s691 + $0x74] sm:%s684]
                %752 = vst [vmem:[%s692 + $0xb4] sm:%s684] %v751
                %v753 = vld [vmem:[%s691 + $0x78] sm:%s684]
                %754 = vst [vmem:[%s692 + $0xb8] sm:%s684] %v753
                %v755 = vld [vmem:[%s691 + $0x7c] sm:%s684]
                %756 = vst [vmem:[%s692 + $0xbc] sm:%s684] %v755
                %v757 = vld [vmem:[%s691 + $0x80] sm:%s684]
                %758 = vst [vmem:[%s692 + $0x100] sm:%s684] %v757
                %v759 = vld [vmem:[%s691 + $0x84] sm:%s684]
                %760 = vst [vmem:[%s692 + $0x104] sm:%s684] %v759
                %v761 = vld [vmem:[%s691 + $0x88] sm:%s684]
                %762 = vst [vmem:[%s692 + $0x108] sm:%s684] %v761
                %v763 = vld [vmem:[%s691 + $0x8c] sm:%s684]
                %764 = vst [vmem:[%s692 + $0x10c] sm:%s684] %v763
                %v765 = vld [vmem:[%s691 + $0x90] sm:%s684]
                %766 = vst [vmem:[%s692 + $0x110] sm:%s684] %v765
                %v767 = vld [vmem:[%s691 + $0x94] sm:%s684]
                %768 = vst [vmem:[%s692 + $0x114] sm:%s684] %v767
                %v769 = vld [vmem:[%s691 + $0x98] sm:%s684]
                %770 = vst [vmem:[%s692 + $0x118] sm:%s684] %v769
                %v771 = vld [vmem:[%s691 + $0x9c] sm:%s684]
                %772 = vst [vmem:[%s692 + $0x11c] sm:%s684] %v771
                %v773 = vld [vmem:[%s691 + $0xa0] sm:%s684]
                %774 = vst [vmem:[%s692 + $0x120] sm:%s684] %v773
                %v775 = vld [vmem:[%s691 + $0xa4] sm:%s684]
                %776 = vst [vmem:[%s692 + $0x124] sm:%s684] %v775
                %v777 = vld [vmem:[%s691 + $0xa8] sm:%s684]
                %778 = vst [vmem:[%s692 + $0x128] sm:%s684] %v777
                %v779 = vld [vmem:[%s691 + $0xac] sm:%s684]
                %780 = vst [vmem:[%s692 + $0x12c] sm:%s684] %v779
                %v781 = vld [vmem:[%s691 + $0xb0] sm:%s684]
                %782 = vst [vmem:[%s692 + $0x130] sm:%s684] %v781
                %v783 = vld [vmem:[%s691 + $0xb4] sm:%s684]
                %784 = vst [vmem:[%s692 + $0x134] sm:%s684] %v783
                %v785 = vld [vmem:[%s691 + $0xb8] sm:%s684]
                %786 = vst [vmem:[%s692 + $0x138] sm:%s684] %v785
                %v787 = vld [vmem:[%s691 + $0xbc] sm:%s684]
                %788 = vst [vmem:[%s692 + $0x13c] sm:%s684] %v787
                %v789 = vld [vmem:[%s691 + $0xc0] sm:%s684]
                %790 = vst [vmem:[%s692 + $0x180] sm:%s684] %v789
                %v791 = vld [vmem:[%s691 + $0xc4] sm:%s684]
                %792 = vst [vmem:[%s692 + $0x184] sm:%s684] %v791
                %v793 = vld [vmem:[%s691 + $0xc8] sm:%s684]
                %794 = vst [vmem:[%s692 + $0x188] sm:%s684] %v793
                %v795 = vld [vmem:[%s691 + $0xcc] sm:%s684]
                %796 = vst [vmem:[%s692 + $0x18c] sm:%s684] %v795
                %v797 = vld [vmem:[%s691 + $0xd0] sm:%s684]
                %798 = vst [vmem:[%s692 + $0x190] sm:%s684] %v797
                %v799 = vld [vmem:[%s691 + $0xd4] sm:%s684]
                %800 = vst [vmem:[%s692 + $0x194] sm:%s684] %v799
                %v801 = vld [vmem:[%s691 + $0xd8] sm:%s684]
                %802 = vst [vmem:[%s692 + $0x198] sm:%s684] %v801
                %v803 = vld [vmem:[%s691 + $0xdc] sm:%s684]
                %804 = vst [vmem:[%s692 + $0x19c] sm:%s684] %v803
                %v805 = vld [vmem:[%s691 + $0xe0] sm:%s684]
                %806 = vst [vmem:[%s692 + $0x1a0] sm:%s684] %v805
                %v807 = vld [vmem:[%s691 + $0xe4] sm:%s684]
                %808 = vst [vmem:[%s692 + $0x1a4] sm:%s684] %v807
                %v809 = vld [vmem:[%s691 + $0xe8] sm:%s684]
                %810 = vst [vmem:[%s692 + $0x1a8] sm:%s684] %v809
                %v811 = vld [vmem:[%s691 + $0xec] sm:%s684]
                %812 = vst [vmem:[%s692 + $0x1ac] sm:%s684] %v811
                %v813 = vld [vmem:[%s691 + $0xf0] sm:%s684]
                %814 = vst [vmem:[%s692 + $0x1b0] sm:%s684] %v813
                %v815 = vld [vmem:[%s691 + $0xf4] sm:%s684]
                %816 = vst [vmem:[%s692 + $0x1b4] sm:%s684] %v815
                %v817 = vld [vmem:[%s691 + $0xf8] sm:%s684]
                %818 = vst [vmem:[%s692 + $0x1b8] sm:%s684] %v817
                %v819 = vld [vmem:[%s691 + $0xfc] sm:%s684]
                %820 = vst [vmem:[%s692 + $0x1bc] sm:%s684] %v819
              $region61: #{tpu_custom_call.1} parent=55 // loop_footer
                %s690 = sadd.s32 1, %s686
              $region62: #{tpu_custom_call.1} parent=55 // loop_footer_branch
                %685 = sbr.rel target = $region58
              $region63: #{tpu_custom_call.1} parent=55 // loop_exit
                _
            $region56: #{tpu_custom_call.1} parent=47 // pred_fallthru
              _
          $region48: #{tpu_custom_call.1} parent=43 // pred_fallthru
            _
          %969 = vnop
        $region44: #{tpu_custom_call.1} parent=31 // pred_fallthru
          _
      $region32: #{tpu_custom_call.1} parent=5 // pred_fallthru
        _
      %p970 = scmp.le.s32.totalorder 2, %s13
      // Predicated region
      $region82: #{tpu_custom_call.1} parent=5 // pred_check
        %p971 = pneg %p970
      $region83: #{tpu_custom_call.1} parent=5 // pred_check_branch
        %973 = sbr.rel (%p971) target = $region85
      $region84: #{tpu_custom_call.1} parent=5 // pred_region
        %s974 = ssub.s32 %s13, 2
        // Predicated region
        $region86: #{tpu_custom_call.1} parent=84 // pred_check
          %p975 = pneg %p126
        $region87: #{tpu_custom_call.1} parent=84 // pred_check_branch
          %977 = sbr.rel (%p975) target = $region89
        $region88: #{tpu_custom_call.1} parent=84 // pred_region
          %s978 = sand.u32 %s111, 1
          %s979 = sand.u32 %s111, 1
          %s980 = smul.addr %s979, 256
          %s981 = scalar_lea.vmem [#allocation6], %s980
        $region89: #{tpu_custom_call.1} parent=84 // pred_fallthru
          _
      $region85: #{tpu_custom_call.1} parent=5 // pred_fallthru
        _
    $region6: #{tpu_custom_call.1} parent=1 // loop_footer
      %s17 = sadd.s32 1, %s13
    $region7: #{tpu_custom_call.1} parent=1 // loop_footer_branch
      %12 = sbr.rel target = $region3
    $region8: #{tpu_custom_call.1} parent=1 // loop_exit
      _
    %982 = vsyncpa [#allocation3], 1
    %s983 = scalar_lea.sflag [#allocation3], 1
    %984 = vsyncpa %s983, 1
    %985 = vsyncpa [#allocation5], 1

</llo_original>
